<compile_context>
chip_gen: v7x
topology: tpu7x:2x2x1
jax: 0.10.0
libtpu: 0.0.40
codegen_flags: <defaults>
</compile_context>

<pallas_src>
import jax
import jax.numpy as jnp
from jax import lax
from jax.experimental import pallas as pl
from jax.experimental.pallas import tpu as pltpu

# ---- hyper-parameters (match RGCL_Loss.__init__ defaults unless noted) ----
GAMMA = 0.8
EPS = 1e-10
TAU_MIN, TAU_MAX = 0.005, 0.05
RHO_I = 8.0
RHO_T = 8.0
ETA_INIT = 1e-5
BETA_U = 0.5
GRAD_CLIP = 5.0


def rgcl_kernel(epoch_ref,
                img_ref, txt_ref,
                diag_c_ref, diag_r_ref,
                tau_i_ref, tau_t_ref,
                old_b_i_ref, old_b_t_ref,
                old_s_i_ref, old_s_t_ref,
                old_u_i_ref, old_u_t_ref,
                # outputs
                out_i_ref,     # [B, 4]: cols = new_b_I, new_s_I, new_u_I, new_tau_I
                out_t_ref):    # [8, B]: rows 0-3 = b_T, s_T, u_T, tau_T;
                               #         rows 4-6 = loss, mean(tw_I), mean(tw_T)
    B = img_ref.shape[0]
    inv_B = 1.0 / B

    out_t_ref[...] = jnp.zeros_like(out_t_ref)

    # sim[i, j] = <img_i, txt_j>  -- bf16 x bf16 on the MXU, f32 accumulation.
    sim = lax.dot_general(img_ref[...], txt_ref[...],
                          (((1,), (1,)), ((), ())),
                          preferred_element_type=jnp.float32)

    # epoch == 0 -> cold start (s = g), else moving average with rescaling
    warm = (epoch_ref[0] != 0).astype(jnp.float32)

    # ----------------------- image side (row-wise) -----------------------
    diag_c = diag_c_ref[...]                       # [B,1] ~= diag(sim)
    inv_tau_i = 1.0 / tau_i_ref[...]               # O(B) divide, B^2 multiplies on VPU
    old_b_i = old_b_i_ref[...]

    image_diffs = sim - diag_c                     # diagonal ~ 0
    image_dt = image_diffs * inv_tau_i
    new_b_i = jnp.maximum(jnp.max(image_dt, axis=1, keepdims=True), old_b_i)  # [B,1]

    exp_i = jnp.exp(image_dt - new_b_i)            # unmasked (diag term = exp(-b))
    g_i = jnp.sum(exp_i, axis=1, keepdims=True) - jnp.exp(-new_b_i)

    s_i_warm = (1.0 - GAMMA) * old_s_i_ref[...] * jnp.exp(old_b_i - new_b_i) + GAMMA * g_i
    s_i = warm * s_i_warm + (1.0 - warm) * g_i
    inv_s_i = 1.0 / (s_i + EPS)                    # O(B) divide only

    sum_ed_i = jnp.sum(exp_i * image_diffs, axis=1, keepdims=True)
    sum_et_i = jnp.sum(exp_i * image_dt, axis=1, keepdims=True)
    image_loss = inv_s_i * sum_ed_i                                   # [B,1]

    tw_i = jnp.log(s_i / (B - 1.0)) + new_b_i + RHO_I - inv_s_i * sum_et_i
    # PyTorch applies clamp_ in place (shared storage via squeeze()), so the
    # returned temp-weight mean is the mean of the CLIPPED values.
    tw_i_c = jnp.clip(tw_i, -GRAD_CLIP, GRAD_CLIP)
    new_u_i = (1.0 - BETA_U) * old_u_i_ref[...] + BETA_U * tw_i_c
    new_tau_i = jnp.clip(tau_i_ref[...] - ETA_INIT * new_u_i, TAU_MIN, TAU_MAX)

    out_i_ref[:, 0:1] = new_b_i
    out_i_ref[:, 1:2] = s_i
    out_i_ref[:, 2:3] = new_u_i
    out_i_ref[:, 3:4] = new_tau_i

    # ----------------------- text side (column-wise) ---------------------
    diag_r = diag_r_ref[...]                       # [1,B]
    inv_tau_t = 1.0 / tau_t_ref[...]
    old_b_t = old_b_t_ref[...]

    text_diffs = sim - diag_r
    text_dt = text_diffs * inv_tau_t
    new_b_t = jnp.maximum(jnp.max(text_dt, axis=0, keepdims=True), old_b_t)   # [1,B]

    exp_t = jnp.exp(text_dt - new_b_t)
    g_t = jnp.sum(exp_t, axis=0, keepdims=True) - jnp.exp(-new_b_t)

    s_t_warm = (1.0 - GAMMA) * old_s_t_ref[...] * jnp.exp(old_b_t - new_b_t) + GAMMA * g_t
    s_t = warm * s_t_warm + (1.0 - warm) * g_t
    inv_s_t = 1.0 / (s_t + EPS)

    sum_ed_t = jnp.sum(exp_t * text_diffs, axis=0, keepdims=True)
    sum_et_t = jnp.sum(exp_t * text_dt, axis=0, keepdims=True)
    text_loss = inv_s_t * sum_ed_t                                    # [1,B]

    tw_t = jnp.log(s_t / (B - 1.0)) + new_b_t + RHO_T - inv_s_t * sum_et_t
    tw_t_c = jnp.clip(tw_t, -GRAD_CLIP, GRAD_CLIP)
    new_u_t = (1.0 - BETA_U) * old_u_t_ref[...] + BETA_U * tw_t_c
    new_tau_t = jnp.clip(tau_t_ref[...] - ETA_INIT * new_u_t, TAU_MIN, TAU_MAX)

    out_t_ref[0:1, :] = new_b_t
    out_t_ref[1:2, :] = s_t
    out_t_ref[2:3, :] = new_u_t
    out_t_ref[3:4, :] = new_tau_t

    # ----------------------- scalars -------------------------------------
    loss = (jnp.sum(image_loss, axis=0, keepdims=True) * inv_B
            + jnp.sum(text_loss, axis=1, keepdims=True) * inv_B)      # (1,1)
    tw_i_mean = jnp.sum(tw_i_c, axis=0, keepdims=True) * inv_B        # (1,1)
    tw_t_mean = jnp.sum(tw_t_c, axis=1, keepdims=True) * inv_B        # (1,1)
    out_t_ref[4:5, :] = jnp.broadcast_to(loss, (1, B))
    out_t_ref[5:6, :] = jnp.broadcast_to(tw_i_mean, (1, B))
    out_t_ref[6:7, :] = jnp.broadcast_to(tw_t_mean, (1, B))


def rgcl_forward(image_features, text_features, image_ids, text_ids, epoch, state):
    """Returns (loss, tau_img_mean, tau_txt_mean, eta, tw_img_mean, tw_txt_mean), new_state."""
    f32 = jnp.float32
    B, D = image_features.shape

    # bf16 path for the MXU; the diagonal is computed from the SAME bf16
    # values (cast back to f32) so it matches the MXU's f32-accumulated
    # diagonal to a few ulps -> the diag of image_diffs/text_diffs is ~0.
    img_bf = image_features.astype(jnp.bfloat16)
    txt_bf = text_features.astype(jnp.bfloat16)
    diag = jnp.sum(img_bf.astype(f32) * txt_bf.astype(f32), axis=1)   # [B]

    # --- glue: gather per-sample state by id (outside the kernel) ---
    tau_image = state["tau_I"][image_ids]
    tau_text = state["tau_T"][text_ids]
    old_b_I = state["b_I"][image_ids]
    old_b_T = state["b_T"][text_ids]
    old_s_I = state["s_I"][image_ids]
    old_s_T = state["s_T"][text_ids]
    old_u_I = state["u_I"][image_ids]
    old_u_T = state["u_T"][text_ids]

    col = lambda v: v.reshape(B, 1).astype(f32)
    rowv = lambda v: v.reshape(1, B).astype(f32)

    out_shape = (
        jax.ShapeDtypeStruct((B, 4), f32),   # image-side packed state
        jax.ShapeDtypeStruct((8, B), f32),   # text-side packed state + scalars
    )

    vmem = pl.BlockSpec(memory_space=pltpu.MemorySpace.VMEM)
    smem = pl.BlockSpec(memory_space=pltpu.MemorySpace.SMEM)

    out_i, out_t = pl.pallas_call(
        rgcl_kernel,
        out_shape=out_shape,
        in_specs=[smem] + [vmem] * 12,
        out_specs=(vmem, vmem),
        compiler_params=pltpu.CompilerParams(vmem_limit_bytes=32 * 1024 * 1024),
    )(
        jnp.asarray(epoch, dtype=jnp.int32).reshape(1),
        img_bf, txt_bf,
        col(diag), rowv(diag),
        col(tau_image), rowv(tau_text),
        col(old_b_I), rowv(old_b_T),
        col(old_s_I), rowv(old_s_T),
        col(old_u_I), rowv(old_u_T),
    )

    # --- glue: scatter updated per-sample state back into the big buffers ---
    # (state is donated by the jitted caller, so these update in place.)
    new_state = dict(state)
    new_state["b_I"] = state["b_I"].at[image_ids].set(out_i[:, 0])
    new_state["s_I"] = state["s_I"].at[image_ids].set(out_i[:, 1])
    new_state["u_I"] = state["u_I"].at[image_ids].set(out_i[:, 2])
    new_state["tau_I"] = state["tau_I"].at[image_ids].set(out_i[:, 3])
    new_state["b_T"] = state["b_T"].at[text_ids].set(out_t[0, :])
    new_state["s_T"] = state["s_T"].at[text_ids].set(out_t[1, :])
    new_state["u_T"] = state["u_T"].at[text_ids].set(out_t[2, :])
    new_state["tau_T"] = state["tau_T"].at[text_ids].set(out_t[3, :])

    outputs = (out_t[4, 0], tau_image.mean(), tau_text.mean(), ETA_INIT,
               out_t[5, 0], out_t[6, 0])
    return outputs, new_state


# ---------------- pure-JAX reference (mirrors the PyTorch forward) ----------
def reference_forward(img, txt, image_ids, text_ids, epoch, state):
    # Same bf16-MXU / f32-accumulation similarity as the kernel (the TPU path
    # we implement); the rest of the math stays exact / masked as in PyTorch.
    sim = jnp.dot(img.astype(jnp.bfloat16), txt.astype(jnp.bfloat16).T,
                  preferred_element_type=jnp.float32)
    diag = jnp.diag(sim)
    B = sim.shape[0]
    tau_image = state["tau_I"][image_ids]
    tau_text = state["tau_T"][text_ids]
    image_diffs = sim - diag[:, None]
    text_diffs = sim - diag[None, :]
    idt = image_diffs / tau_image[:, None]
    tdt = text_diffs / tau_text[None, :]
    old_b_I = state["b_I"][image_ids]
    new_b_I = jnp.maximum(idt, old_b_I[:, None]).max(axis=1)
    b_I = state["b_I"].at[image_ids].set(new_b_I)
    old_b_T = state["b_T"][text_ids]
    new_b_T = jnp.maximum(tdt, old_b_T[None, :]).max(axis=0)
    b_T = state["b_T"].at[text_ids].set(new_b_T)
    mask_neg = 1.0 - jnp.eye(B)
    exp_i = jnp.exp(idt - b_I[image_ids][:, None]) * mask_neg
    exp_t = jnp.exp(tdt - b_T[text_ids][None, :]) * mask_neg
    g_I = exp_i.sum(axis=1, keepdims=True)
    g_T = exp_t.sum(axis=0, keepdims=True)
    if epoch == 0:
        s_I_b, s_T_b = g_I, g_T
    else:
        s_I_b = ((1 - GAMMA) * state["s_I"][image_ids] * jnp.exp(old_b_I - b_I[image_ids])
                 + GAMMA * g_I.squeeze()).reshape(g_I.shape)
        s_T_b = ((1 - GAMMA) * state["s_T"][text_ids] * jnp.exp(old_b_T - b_T[text_ids])
                 + GAMMA * g_T.squeeze()).reshape(g_T.shape)
    s_I = state["s_I"].at[image_ids].set(s_I_b.squeeze())
    s_T = state["s_T"].at[text_ids].set(s_T_b.squeeze())
    w_i = exp_i / (s_I_b + EPS)
    w_t = exp_t / (s_T_b + EPS)
    image_loss = (w_i * image_diffs).sum(axis=1, keepdims=True)
    text_loss = (w_t * text_diffs).sum(axis=0, keepdims=True)
    total_loss = image_loss.mean() + text_loss.mean()
    twi = (jnp.log(s_I_b / (B - 1)) + b_I[image_ids][:, None] + RHO_I
           - (w_i * idt).sum(axis=1, keepdims=True))
    twt = (jnp.log(s_T_b / (B - 1)) + b_T[text_ids][None, :] + RHO_T
           - (w_t * tdt).sum(axis=0, keepdims=True))
    twi_c = jnp.clip(twi, -GRAD_CLIP, GRAD_CLIP)
    twt_c = jnp.clip(twt, -GRAD_CLIP, GRAD_CLIP)
    u_I_new = (1 - BETA_U) * state["u_I"][image_ids] + BETA_U * twi_c.squeeze()
    u_T_new = (1 - BETA_U) * state["u_T"][text_ids] + BETA_U * twt_c.squeeze()
    u_I = state["u_I"].at[image_ids].set(u_I_new)
    u_T = state["u_T"].at[text_ids].set(u_T_new)
    tau_I = state["tau_I"].at[image_ids].set(
        jnp.clip(tau_image - ETA_INIT * u_I_new, TAU_MIN, TAU_MAX))
    tau_T = state["tau_T"].at[text_ids].set(
        jnp.clip(tau_text - ETA_INIT * u_T_new, TAU_MIN, TAU_MAX))
    new_state = dict(state, b_I=b_I, b_T=b_T, s_I=s_I, s_T=s_T,
                     u_I=u_I, u_T=u_T, tau_I=tau_I, tau_T=tau_T)
    return (total_loss, tau_image.mean(), tau_text.mean(), ETA_INIT,
            twi_c.mean(), twt_c.mean()), new_state


def make_state(N, tau_init):
    return dict(
        s_I=jnp.zeros(N, jnp.float32), s_T=jnp.zeros(N, jnp.float32),
        b_I=jnp.zeros(N, jnp.float32), b_T=jnp.zeros(N, jnp.float32),
        u_I=jnp.zeros(N, jnp.float32), u_T=jnp.zeros(N, jnp.float32),
        tau_I=jnp.full((N,), tau_init, jnp.float32),
        tau_T=jnp.full((N,), tau_init, jnp.float32),
    )


if __name__ == "__main__":
    B, D, N = 8, 32, 64          # batch, feature dim, state table sizes (N_I = N_T = N)
    TAU_INIT = 0.05              # constructor arg (kept inside [tau_min, tau_max])

    key = jax.random.PRNGKey(0)
    k1, k2 = jax.random.split(key)
    img = jax.random.normal(k1, (B, D), jnp.float32)
    txt = jax.random.normal(k2, (B, D), jnp.float32)
    img = img / jnp.linalg.norm(img, axis=-1, keepdims=True)
    txt = txt / jnp.linalg.norm(txt, axis=-1, keepdims=True)

    image_ids = jnp.arange(B, dtype=jnp.int32) * 3        # distinct ids < N
    text_ids = jnp.arange(B, dtype=jnp.int32) * 5 + 1     # distinct ids < N

    # independent copies: `state` is donated to the jitted step, ref_state is not
    state = make_state(N, TAU_INIT)
    ref_state = make_state(N, TAU_INIT)

    rgcl_step = jax.jit(rgcl_forward, donate_argnums=5)

    for epoch in (0, 1):   # exercise both the cold-start and moving-average paths
        out, state = rgcl_step(img, txt, image_ids, text_ids, epoch, state)
        jax.block_until_ready(out)
        ref_out, ref_state = reference_forward(img, txt, image_ids, text_ids, epoch, ref_state)
        for a, b in zip(out, ref_out):
            assert jnp.allclose(jnp.asarray(a), jnp.asarray(b), rtol=1e-2, atol=5e-4), (a, b)
        for name in state:
            assert jnp.allclose(state[name], ref_state[name], rtol=1e-2, atol=5e-4), name

    print("KERNEL_OK")
</pallas_src>

<mosaic_0001>
module attributes {stable_mosaic.version = 11 : i64} {
  func.func @rgcl_kernel(%arg0: memref<1xi32, #tpu.memory_space<smem>>, %arg1: memref<8x32xbf16, #tpu.memory_space<vmem>>, %arg2: memref<8x32xbf16, #tpu.memory_space<vmem>>, %arg3: memref<8x1xf32, #tpu.memory_space<vmem>>, %arg4: memref<1x8xf32, #tpu.memory_space<vmem>>, %arg5: memref<8x1xf32, #tpu.memory_space<vmem>>, %arg6: memref<1x8xf32, #tpu.memory_space<vmem>>, %arg7: memref<8x1xf32, #tpu.memory_space<vmem>>, %arg8: memref<1x8xf32, #tpu.memory_space<vmem>>, %arg9: memref<8x1xf32, #tpu.memory_space<vmem>>, %arg10: memref<1x8xf32, #tpu.memory_space<vmem>>, %arg11: memref<8x1xf32, #tpu.memory_space<vmem>>, %arg12: memref<1x8xf32, #tpu.memory_space<vmem>>, %arg13: memref<8x4xf32, #tpu.memory_space<vmem>>, %arg14: memref<8x8xf32, #tpu.memory_space<vmem>>) attributes {dimension_semantics = [], scalar_prefetch = 0 : i64, scratch_operands = 0 : i64, tpu.core_type = #tpu.core_type<tc>} {
    %cst = arith.constant 0.000000e+00 : f32
    %0 = vector.broadcast %cst : f32 to vector<8x8xf32>
    %c0 = arith.constant 0 : index
    %c0_0 = arith.constant 0 : index
    %1 = vector.load %arg14[%c0, %c0_0] : memref<8x8xf32, #tpu.memory_space<vmem>>, vector<8x8xf32>
    tpu.vector_store %arg14[%c0, %c0_0], %0 {strides = array<i32>} : memref<8x8xf32, #tpu.memory_space<vmem>>, vector<8x8xf32>,
    %c0_1 = arith.constant 0 : index
    %c0_2 = arith.constant 0 : index
    %2 = vector.load %arg1[%c0_1, %c0_2] : memref<8x32xbf16, #tpu.memory_space<vmem>>, vector<8x32xbf16>
    %c0_3 = arith.constant 0 : index
    %c0_4 = arith.constant 0 : index
    %3 = vector.load %arg2[%c0_3, %c0_4] : memref<8x32xbf16, #tpu.memory_space<vmem>>, vector<8x32xbf16>
    %cst_5 = arith.constant dense<0.000000e+00> : vector<8x8xf32>
    %4 = tpu.matmul %2, %3, %cst_5 {dimension_numbers = #tpu.dot_dimension_numbers<[1], [1], [0], [0], [0, 0, 1, 0], [], []>} : vector<8x32xbf16>, vector<8x32xbf16>, vector<8x8xf32> -> vector<8x8xf32>
    %c0_6 = arith.constant 0 : index
    %5 = memref.load %arg0[%c0_6] : memref<1xi32, #tpu.memory_space<smem>>
    %c0_i32 = arith.constant 0 : i32
    %6 = arith.cmpi ne, %5, %c0_i32 : i32
    %7 = arith.extui %6 : i1 to i32
    %8 = arith.sitofp %7 : i32 to f32
    %c0_7 = arith.constant 0 : index
    %c0_8 = arith.constant 0 : index
    %9 = vector.load %arg3[%c0_7, %c0_8] : memref<8x1xf32, #tpu.memory_space<vmem>>, vector<8x1xf32>
    %c0_9 = arith.constant 0 : index
    %c0_10 = arith.constant 0 : index
    %10 = vector.load %arg5[%c0_9, %c0_10] : memref<8x1xf32, #tpu.memory_space<vmem>>, vector<8x1xf32>
    %cst_11 = arith.constant 1.000000e+00 : f32
    %11 = vector.broadcast %cst_11 : f32 to vector<8x1xf32>
    %12 = arith.divf %11, %10 : vector<8x1xf32>
    %c0_12 = arith.constant 0 : index
    %c0_13 = arith.constant 0 : index
    %13 = vector.load %arg7[%c0_12, %c0_13] : memref<8x1xf32, #tpu.memory_space<vmem>>, vector<8x1xf32>
    %14 = vector.broadcast %9 : vector<8x1xf32> to vector<8x8xf32>
    %15 = arith.subf %4, %14 : vector<8x8xf32>
    %16 = vector.broadcast %12 : vector<8x1xf32> to vector<8x8xf32>
    %17 = arith.mulf %15, %16 : vector<8x8xf32>
    %cst_14 = arith.constant dense<0xFF800000> : vector<8xf32>
    %18 = vector.multi_reduction <maximumf>, %17, %cst_14 [1] : vector<8x8xf32> to vector<8xf32>
    %19 = vector.shape_cast %18 : vector<8xf32> to vector<8x1xf32>
    %20 = arith.maximumf %19, %13 : vector<8x1xf32>
    %21 = vector.broadcast %20 : vector<8x1xf32> to vector<8x8xf32>
    %22 = arith.subf %17, %21 : vector<8x8xf32>
    %23 = math.exp %22 : vector<8x8xf32>
    %cst_15 = arith.constant dense<0.000000e+00> : vector<8xf32>
    %24 = vector.multi_reduction <add>, %23, %cst_15 [1] : vector<8x8xf32> to vector<8xf32>
    %25 = vector.shape_cast %24 : vector<8xf32> to vector<8x1xf32>
    %cst_16 = arith.constant 0.000000e+00 : f32
    %26 = vector.broadcast %cst_16 : f32 to vector<8x1xf32>
    %27 = arith.subf %26, %20 : vector<8x1xf32>
    %28 = math.exp %27 : vector<8x1xf32>
    %29 = arith.subf %25, %28 : vector<8x1xf32>
    %c0_17 = arith.constant 0 : index
    %c0_18 = arith.constant 0 : index
    %30 = vector.load %arg9[%c0_17, %c0_18] : memref<8x1xf32, #tpu.memory_space<vmem>>, vector<8x1xf32>
    %cst_19 = arith.constant 2.000000e-01 : f32
    %31 = vector.broadcast %cst_19 : f32 to vector<8x1xf32>
    %32 = arith.mulf %31, %30 : vector<8x1xf32>
    %33 = arith.subf %13, %20 : vector<8x1xf32>
    %34 = math.exp %33 : vector<8x1xf32>
    %35 = arith.mulf %32, %34 : vector<8x1xf32>
    %cst_20 = arith.constant 8.000000e-01 : f32
    %36 = vector.broadcast %cst_20 : f32 to vector<8x1xf32>
    %37 = arith.mulf %36, %29 : vector<8x1xf32>
    %38 = arith.addf %35, %37 : vector<8x1xf32>
    %39 = vector.broadcast %8 : f32 to vector<8x1xf32>
    %40 = arith.mulf %39, %38 : vector<8x1xf32>
    %cst_21 = arith.constant 1.000000e+00 : f32
    %41 = arith.subf %cst_21, %8 : f32
    %42 = vector.broadcast %41 : f32 to vector<8x1xf32>
    %43 = arith.mulf %42, %29 : vector<8x1xf32>
    %44 = arith.addf %40, %43 : vector<8x1xf32>
    %cst_22 = arith.constant 1.000000e-10 : f32
    %45 = vector.broadcast %cst_22 : f32 to vector<8x1xf32>
    %46 = arith.addf %44, %45 : vector<8x1xf32>
    %cst_23 = arith.constant 1.000000e+00 : f32
    %47 = vector.broadcast %cst_23 : f32 to vector<8x1xf32>
    %48 = arith.divf %47, %46 : vector<8x1xf32>
    %49 = arith.mulf %23, %15 : vector<8x8xf32>
    %cst_24 = arith.constant dense<0.000000e+00> : vector<8xf32>
    %50 = vector.multi_reduction <add>, %49, %cst_24 [1] : vector<8x8xf32> to vector<8xf32>
    %51 = vector.shape_cast %50 : vector<8xf32> to vector<8x1xf32>
    %52 = arith.mulf %23, %17 : vector<8x8xf32>
    %cst_25 = arith.constant dense<0.000000e+00> : vector<8xf32>
    %53 = vector.multi_reduction <add>, %52, %cst_25 [1] : vector<8x8xf32> to vector<8xf32>
    %54 = vector.shape_cast %53 : vector<8xf32> to vector<8x1xf32>
    %55 = arith.mulf %48, %51 : vector<8x1xf32>
    %cst_26 = arith.constant 7.000000e+00 : f32
    %56 = vector.broadcast %cst_26 : f32 to vector<8x1xf32>
    %57 = arith.divf %44, %56 : vector<8x1xf32>
    %58 = math.log %57 : vector<8x1xf32>
    %59 = arith.addf %58, %20 : vector<8x1xf32>
    %cst_27 = arith.constant 8.000000e+00 : f32
    %60 = vector.broadcast %cst_27 : f32 to vector<8x1xf32>
    %61 = arith.addf %59, %60 : vector<8x1xf32>
    %62 = arith.mulf %48, %54 : vector<8x1xf32>
    %63 = arith.subf %61, %62 : vector<8x1xf32>
    %cst_28 = arith.constant -5.000000e+00 : f32
    %cst_29 = arith.constant 5.000000e+00 : f32
    %64 = vector.broadcast %cst_28 : f32 to vector<8x1xf32>
    %65 = arith.maximumf %64, %63 : vector<8x1xf32>
    %66 = vector.broadcast %cst_29 : f32 to vector<8x1xf32>
    %67 = arith.minimumf %66, %65 : vector<8x1xf32>
    %c0_30 = arith.constant 0 : index
    %c0_31 = arith.constant 0 : index
    %68 = vector.load %arg11[%c0_30, %c0_31] : memref<8x1xf32, #tpu.memory_space<vmem>>, vector<8x1xf32>
    %cst_32 = arith.constant 5.000000e-01 : f32
    %69 = vector.broadcast %cst_32 : f32 to vector<8x1xf32>
    %70 = arith.mulf %69, %68 : vector<8x1xf32>
    %cst_33 = arith.constant 5.000000e-01 : f32
    %71 = vector.broadcast %cst_33 : f32 to vector<8x1xf32>
    %72 = arith.mulf %71, %67 : vector<8x1xf32>
    %73 = arith.addf %70, %72 : vector<8x1xf32>
    %c0_34 = arith.constant 0 : index
    %c0_35 = arith.constant 0 : index
    %74 = vector.load %arg5[%c0_34, %c0_35] : memref<8x1xf32, #tpu.memory_space<vmem>>, vector<8x1xf32>
    %cst_36 = arith.constant 9.99999974E-6 : f32
    %75 = vector.broadcast %cst_36 : f32 to vector<8x1xf32>
    %76 = arith.mulf %75, %73 : vector<8x1xf32>
    %77 = arith.subf %74, %76 : vector<8x1xf32>
    %cst_37 = arith.constant 5.000000e-03 : f32
    %cst_38 = arith.constant 5.000000e-02 : f32
    %78 = vector.broadcast %cst_37 : f32 to vector<8x1xf32>
    %79 = arith.maximumf %78, %77 : vector<8x1xf32>
    %80 = vector.broadcast %cst_38 : f32 to vector<8x1xf32>
    %81 = arith.minimumf %80, %79 : vector<8x1xf32>
    %c0_39 = arith.constant 0 : index
    %c0_40 = arith.constant 0 : index
    %82 = vector.load %arg13[%c0_39, %c0_40] : memref<8x4xf32, #tpu.memory_space<vmem>>, vector<8x1xf32>
    tpu.vector_store %arg13[%c0_39, %c0_40], %20 {strides = array<i32>} : memref<8x4xf32, #tpu.memory_space<vmem>>, vector<8x1xf32>,
    %c0_41 = arith.constant 0 : index
    %c1 = arith.constant 1 : index
    %83 = vector.load %arg13[%c0_41, %c1] : memref<8x4xf32, #tpu.memory_space<vmem>>, vector<8x1xf32>
    tpu.vector_store %arg13[%c0_41, %c1], %44 {strides = array<i32>} : memref<8x4xf32, #tpu.memory_space<vmem>>, vector<8x1xf32>,
    %c0_42 = arith.constant 0 : index
    %c2 = arith.constant 2 : index
    %84 = vector.load %arg13[%c0_42, %c2] : memref<8x4xf32, #tpu.memory_space<vmem>>, vector<8x1xf32>
    tpu.vector_store %arg13[%c0_42, %c2], %73 {strides = array<i32>} : memref<8x4xf32, #tpu.memory_space<vmem>>, vector<8x1xf32>,
    %c0_43 = arith.constant 0 : index
    %c3 = arith.constant 3 : index
    %85 = vector.load %arg13[%c0_43, %c3] : memref<8x4xf32, #tpu.memory_space<vmem>>, vector<8x1xf32>
    tpu.vector_store %arg13[%c0_43, %c3], %81 {strides = array<i32>} : memref<8x4xf32, #tpu.memory_space<vmem>>, vector<8x1xf32>,
    %c0_44 = arith.constant 0 : index
    %c0_45 = arith.constant 0 : index
    %86 = vector.load %arg4[%c0_44, %c0_45] : memref<1x8xf32, #tpu.memory_space<vmem>>, vector<1x8xf32>
    %c0_46 = arith.constant 0 : index
    %c0_47 = arith.constant 0 : index
    %87 = vector.load %arg6[%c0_46, %c0_47] : memref<1x8xf32, #tpu.memory_space<vmem>>, vector<1x8xf32>
    %cst_48 = arith.constant 1.000000e+00 : f32
    %88 = vector.broadcast %cst_48 : f32 to vector<1x8xf32>
    %89 = arith.divf %88, %87 : vector<1x8xf32>
    %c0_49 = arith.constant 0 : index
    %c0_50 = arith.constant 0 : index
    %90 = vector.load %arg8[%c0_49, %c0_50] : memref<1x8xf32, #tpu.memory_space<vmem>>, vector<1x8xf32>
    %91 = vector.broadcast %86 : vector<1x8xf32> to vector<8x8xf32>
    %92 = arith.subf %4, %91 : vector<8x8xf32>
    %93 = vector.broadcast %89 : vector<1x8xf32> to vector<8x8xf32>
    %94 = arith.mulf %92, %93 : vector<8x8xf32>
    %cst_51 = arith.constant dense<0xFF800000> : vector<8xf32>
    %95 = vector.multi_reduction <maximumf>, %94, %cst_51 [0] : vector<8x8xf32> to vector<8xf32>
    %96 = vector.shape_cast %95 : vector<8xf32> to vector<1x8xf32>
    %97 = arith.maximumf %96, %90 : vector<1x8xf32>
    %98 = vector.broadcast %97 : vector<1x8xf32> to vector<8x8xf32>
    %99 = arith.subf %94, %98 : vector<8x8xf32>
    %100 = math.exp %99 : vector<8x8xf32>
    %cst_52 = arith.constant dense<0.000000e+00> : vector<8xf32>
    %101 = vector.multi_reduction <add>, %100, %cst_52 [0] : vector<8x8xf32> to vector<8xf32>
    %102 = vector.shape_cast %101 : vector<8xf32> to vector<1x8xf32>
    %cst_53 = arith.constant 0.000000e+00 : f32
    %103 = vector.broadcast %cst_53 : f32 to vector<1x8xf32>
    %104 = arith.subf %103, %97 : vector<1x8xf32>
    %105 = math.exp %104 : vector<1x8xf32>
    %106 = arith.subf %102, %105 : vector<1x8xf32>
    %c0_54 = arith.constant 0 : index
    %c0_55 = arith.constant 0 : index
    %107 = vector.load %arg10[%c0_54, %c0_55] : memref<1x8xf32, #tpu.memory_space<vmem>>, vector<1x8xf32>
    %cst_56 = arith.constant 2.000000e-01 : f32
    %108 = vector.broadcast %cst_56 : f32 to vector<1x8xf32>
    %109 = arith.mulf %108, %107 : vector<1x8xf32>
    %110 = arith.subf %90, %97 : vector<1x8xf32>
    %111 = math.exp %110 : vector<1x8xf32>
    %112 = arith.mulf %109, %111 : vector<1x8xf32>
    %cst_57 = arith.constant 8.000000e-01 : f32
    %113 = vector.broadcast %cst_57 : f32 to vector<1x8xf32>
    %114 = arith.mulf %113, %106 : vector<1x8xf32>
    %115 = arith.addf %112, %114 : vector<1x8xf32>
    %116 = vector.broadcast %8 : f32 to vector<1x8xf32>
    %117 = arith.mulf %116, %115 : vector<1x8xf32>
    %cst_58 = arith.constant 1.000000e+00 : f32
    %118 = arith.subf %cst_58, %8 : f32
    %119 = vector.broadcast %118 : f32 to vector<1x8xf32>
    %120 = arith.mulf %119, %106 : vector<1x8xf32>
    %121 = arith.addf %117, %120 : vector<1x8xf32>
    %cst_59 = arith.constant 1.000000e-10 : f32
    %122 = vector.broadcast %cst_59 : f32 to vector<1x8xf32>
    %123 = arith.addf %121, %122 : vector<1x8xf32>
    %cst_60 = arith.constant 1.000000e+00 : f32
    %124 = vector.broadcast %cst_60 : f32 to vector<1x8xf32>
    %125 = arith.divf %124, %123 : vector<1x8xf32>
    %126 = arith.mulf %100, %92 : vector<8x8xf32>
    %cst_61 = arith.constant dense<0.000000e+00> : vector<8xf32>
    %127 = vector.multi_reduction <add>, %126, %cst_61 [0] : vector<8x8xf32> to vector<8xf32>
    %128 = vector.shape_cast %127 : vector<8xf32> to vector<1x8xf32>
    %129 = arith.mulf %100, %94 : vector<8x8xf32>
    %cst_62 = arith.constant dense<0.000000e+00> : vector<8xf32>
    %130 = vector.multi_reduction <add>, %129, %cst_62 [0] : vector<8x8xf32> to vector<8xf32>
    %131 = vector.shape_cast %130 : vector<8xf32> to vector<1x8xf32>
    %132 = arith.mulf %125, %128 : vector<1x8xf32>
    %cst_63 = arith.constant 7.000000e+00 : f32
    %133 = vector.broadcast %cst_63 : f32 to vector<1x8xf32>
    %134 = arith.divf %121, %133 : vector<1x8xf32>
    %135 = math.log %134 : vector<1x8xf32>
    %136 = arith.addf %135, %97 : vector<1x8xf32>
    %cst_64 = arith.constant 8.000000e+00 : f32
    %137 = vector.broadcast %cst_64 : f32 to vector<1x8xf32>
    %138 = arith.addf %136, %137 : vector<1x8xf32>
    %139 = arith.mulf %125, %131 : vector<1x8xf32>
    %140 = arith.subf %138, %139 : vector<1x8xf32>
    %cst_65 = arith.constant -5.000000e+00 : f32
    %cst_66 = arith.constant 5.000000e+00 : f32
    %141 = vector.broadcast %cst_65 : f32 to vector<1x8xf32>
    %142 = arith.maximumf %141, %140 : vector<1x8xf32>
    %143 = vector.broadcast %cst_66 : f32 to vector<1x8xf32>
    %144 = arith.minimumf %143, %142 : vector<1x8xf32>
    %c0_67 = arith.constant 0 : index
    %c0_68 = arith.constant 0 : index
    %145 = vector.load %arg12[%c0_67, %c0_68] : memref<1x8xf32, #tpu.memory_space<vmem>>, vector<1x8xf32>
    %cst_69 = arith.constant 5.000000e-01 : f32
    %146 = vector.broadcast %cst_69 : f32 to vector<1x8xf32>
    %147 = arith.mulf %146, %145 : vector<1x8xf32>
    %cst_70 = arith.constant 5.000000e-01 : f32
    %148 = vector.broadcast %cst_70 : f32 to vector<1x8xf32>
    %149 = arith.mulf %148, %144 : vector<1x8xf32>
    %150 = arith.addf %147, %149 : vector<1x8xf32>
    %c0_71 = arith.constant 0 : index
    %c0_72 = arith.constant 0 : index
    %151 = vector.load %arg6[%c0_71, %c0_72] : memref<1x8xf32, #tpu.memory_space<vmem>>, vector<1x8xf32>
    %cst_73 = arith.constant 9.99999974E-6 : f32
    %152 = vector.broadcast %cst_73 : f32 to vector<1x8xf32>
    %153 = arith.mulf %152, %150 : vector<1x8xf32>
    %154 = arith.subf %151, %153 : vector<1x8xf32>
    %cst_74 = arith.constant 5.000000e-03 : f32
    %cst_75 = arith.constant 5.000000e-02 : f32
    %155 = vector.broadcast %cst_74 : f32 to vector<1x8xf32>
    %156 = arith.maximumf %155, %154 : vector<1x8xf32>
    %157 = vector.broadcast %cst_75 : f32 to vector<1x8xf32>
    %158 = arith.minimumf %157, %156 : vector<1x8xf32>
    %c0_76 = arith.constant 0 : index
    %c0_77 = arith.constant 0 : index
    %159 = vector.load %arg14[%c0_76, %c0_77] : memref<8x8xf32, #tpu.memory_space<vmem>>, vector<1x8xf32>
    tpu.vector_store %arg14[%c0_76, %c0_77], %97 {strides = array<i32>} : memref<8x8xf32, #tpu.memory_space<vmem>>, vector<1x8xf32>,
    %c1_78 = arith.constant 1 : index
    %c0_79 = arith.constant 0 : index
    %160 = vector.load %arg14[%c1_78, %c0_79] : memref<8x8xf32, #tpu.memory_space<vmem>>, vector<1x8xf32>
    tpu.vector_store %arg14[%c1_78, %c0_79], %121 {strides = array<i32>} : memref<8x8xf32, #tpu.memory_space<vmem>>, vector<1x8xf32>,
    %c2_80 = arith.constant 2 : index
    %c0_81 = arith.constant 0 : index
    %161 = vector.load %arg14[%c2_80, %c0_81] : memref<8x8xf32, #tpu.memory_space<vmem>>, vector<1x8xf32>
    tpu.vector_store %arg14[%c2_80, %c0_81], %150 {strides = array<i32>} : memref<8x8xf32, #tpu.memory_space<vmem>>, vector<1x8xf32>,
    %c3_82 = arith.constant 3 : index
    %c0_83 = arith.constant 0 : index
    %162 = vector.load %arg14[%c3_82, %c0_83] : memref<8x8xf32, #tpu.memory_space<vmem>>, vector<1x8xf32>
    tpu.vector_store %arg14[%c3_82, %c0_83], %158 {strides = array<i32>} : memref<8x8xf32, #tpu.memory_space<vmem>>, vector<1x8xf32>,
    %cst_84 = arith.constant dense<0.000000e+00> : vector<1xf32>
    %163 = vector.multi_reduction <add>, %55, %cst_84 [0] : vector<8x1xf32> to vector<1xf32>
    %164 = vector.shape_cast %163 : vector<1xf32> to vector<1x1xf32>
    %cst_85 = arith.constant 1.250000e-01 : f32
    %165 = vector.broadcast %cst_85 : f32 to vector<1x1xf32>
    %166 = arith.mulf %164, %165 : vector<1x1xf32>
    %cst_86 = arith.constant dense<0.000000e+00> : vector<1xf32>
    %167 = vector.multi_reduction <add>, %132, %cst_86 [1] : vector<1x8xf32> to vector<1xf32>
    %168 = vector.shape_cast %167 : vector<1xf32> to vector<1x1xf32>
    %cst_87 = arith.constant 1.250000e-01 : f32
    %169 = vector.broadcast %cst_87 : f32 to vector<1x1xf32>
    %170 = arith.mulf %168, %169 : vector<1x1xf32>
    %171 = arith.addf %166, %170 : vector<1x1xf32>
    %cst_88 = arith.constant dense<0.000000e+00> : vector<1xf32>
    %172 = vector.multi_reduction <add>, %67, %cst_88 [0] : vector<8x1xf32> to vector<1xf32>
    %173 = vector.shape_cast %172 : vector<1xf32> to vector<1x1xf32>
    %cst_89 = arith.constant 1.250000e-01 : f32
    %174 = vector.broadcast %cst_89 : f32 to vector<1x1xf32>
    %175 = arith.mulf %173, %174 : vector<1x1xf32>
    %cst_90 = arith.constant dense<0.000000e+00> : vector<1xf32>
    %176 = vector.multi_reduction <add>, %144, %cst_90 [1] : vector<1x8xf32> to vector<1xf32>
    %177 = vector.shape_cast %176 : vector<1xf32> to vector<1x1xf32>
    %cst_91 = arith.constant 1.250000e-01 : f32
    %178 = vector.broadcast %cst_91 : f32 to vector<1x1xf32>
    %179 = arith.mulf %177, %178 : vector<1x1xf32>
    %180 = vector.shape_cast %171 : vector<1x1xf32> to vector<1x1xf32>
    %181 = vector.broadcast %180 : vector<1x1xf32> to vector<1x8xf32>
    %c4 = arith.constant 4 : index
    %c0_92 = arith.constant 0 : index
    %182 = vector.load %arg14[%c4, %c0_92] : memref<8x8xf32, #tpu.memory_space<vmem>>, vector<1x8xf32>
    tpu.vector_store %arg14[%c4, %c0_92], %181 {strides = array<i32>} : memref<8x8xf32, #tpu.memory_space<vmem>>, vector<1x8xf32>,
    %183 = vector.shape_cast %175 : vector<1x1xf32> to vector<1x1xf32>
    %184 = vector.broadcast %183 : vector<1x1xf32> to vector<1x8xf32>
    %c5 = arith.constant 5 : index
    %c0_93 = arith.constant 0 : index
    %185 = vector.load %arg14[%c5, %c0_93] : memref<8x8xf32, #tpu.memory_space<vmem>>, vector<1x8xf32>
    tpu.vector_store %arg14[%c5, %c0_93], %184 {strides = array<i32>} : memref<8x8xf32, #tpu.memory_space<vmem>>, vector<1x8xf32>,
    %186 = vector.shape_cast %179 : vector<1x1xf32> to vector<1x1xf32>
    %187 = vector.broadcast %186 : vector<1x1xf32> to vector<1x8xf32>
    %c6 = arith.constant 6 : index
    %c0_94 = arith.constant 0 : index
    %188 = vector.load %arg14[%c6, %c0_94] : memref<8x8xf32, #tpu.memory_space<vmem>>, vector<1x8xf32>
    tpu.vector_store %arg14[%c6, %c0_94], %187 {strides = array<i32>} : memref<8x8xf32, #tpu.memory_space<vmem>>, vector<1x8xf32>,
    return
  }
}

</mosaic_0001>

<llo_original>
// kernel: rgcl_forward.1
$region0: #{rgcl_forward.1}
  #allocation0 [shape = 'u32[]', space=smem, size = 0x4, offset = 0x4, fixed_abs, tag = 'smem constant byte address 0x4 - core index']
  #allocation1 [shape = 'u32[144,128]{1,0:T(1,128)}', space=vmem, size = 0x12000, scoped, tag = 'internal scratch']
  #allocation2 [shape = 's32[1]{0:T(128)S(6)}', space=smem, size = 0x200, scoped, tag = 'scoped memory for rgcl_forward.1']
  %s0 = inlined_call_operand.<no memory space> [shape: s32[1], index: 0, kind: input, shape index: {}]
  %s1 = inlined_call_operand.vmem [shape: bf16[8,32], index: 1, kind: input, shape index: {}]
  %s2 = inlined_call_operand.vmem [shape: bf16[8,32], index: 2, kind: input, shape index: {}]
  %s3 = inlined_call_operand.vmem [shape: f32[8,1], index: 3, kind: input, shape index: {}]
  %s4 = inlined_call_operand.vmem [shape: f32[1,8], index: 4, kind: input, shape index: {}]
  %s5 = inlined_call_operand.vmem [shape: f32[8,1], index: 5, kind: input, shape index: {}]
  %s6 = inlined_call_operand.vmem [shape: f32[1,8], index: 6, kind: input, shape index: {}]
  %s7 = inlined_call_operand.vmem [shape: f32[8,1], index: 7, kind: input, shape index: {}]
  %s8 = inlined_call_operand.vmem [shape: f32[1,8], index: 8, kind: input, shape index: {}]
  %s9 = inlined_call_operand.vmem [shape: f32[8,1], index: 9, kind: input, shape index: {}]
  %s10 = inlined_call_operand.vmem [shape: f32[1,8], index: 10, kind: input, shape index: {}]
  %s11 = inlined_call_operand.vmem [shape: f32[8,1], index: 11, kind: input, shape index: {}]
  %s12 = inlined_call_operand.vmem [shape: f32[1,8], index: 12, kind: input, shape index: {}]
  %s13 = inlined_call_operand.vmem [shape: f32[8,4], index: 13, kind: output, shape index: {0}]
  %s14 = inlined_call_operand.vmem [shape: f32[8,8], index: 14, kind: output, shape index: {1}]
  %15 = xla_tuple %s13, %s14
  %s16 = sld [smem:[#allocation0]]
  $region70: #{rgcl_forward.1} parent=0
    _
  %s18 = ssub.s32 1, %s16
  %s19 = scalar_select 0, %s18, %s16
  %20 = sst [smem:[#allocation2]] %s0
  // Predicated region
  $region2: #{rgcl_forward.1} parent=0 // pred_check
    _
  $region3: #{rgcl_forward.1} parent=0 // pred_check_branch
    %22 = sbr.rel (0) target = $region5
  $region4: #{rgcl_forward.1} parent=0 // pred_region
    _
  $region5: #{rgcl_forward.1} parent=0 // pred_fallthru
    _
  // Predicated region
  $region6: #{rgcl_forward.1} parent=0 // pred_check
    _
  $region7: #{rgcl_forward.1} parent=0 // pred_check_branch
    %24 = sbr.rel (0) target = $region9
  $region8: #{rgcl_forward.1} parent=0 // pred_region
    _
  $region9: #{rgcl_forward.1} parent=0 // pred_fallthru
    _
  // Predicated region
  $region10: #{rgcl_forward.1} parent=0 // pred_check
    _
  $region11: #{rgcl_forward.1} parent=0 // pred_check_branch
    %26 = sbr.rel (0) target = $region13
  $region12: #{rgcl_forward.1} parent=0 // pred_region
    _
  $region13: #{rgcl_forward.1} parent=0 // pred_fallthru
    _
  // Predicated region
  $region14: #{rgcl_forward.1} parent=0 // pred_check
    _
  $region15: #{rgcl_forward.1} parent=0 // pred_check_branch
    %28 = sbr.rel (0) target = $region17
  $region16: #{rgcl_forward.1} parent=0 // pred_region
    _
  $region17: #{rgcl_forward.1} parent=0 // pred_fallthru
    _
  // Predicated region
  $region18: #{rgcl_forward.1} parent=0 // pred_check
    _
  $region19: #{rgcl_forward.1} parent=0 // pred_check_branch
    %30 = sbr.rel (0) target = $region21
  $region20: #{rgcl_forward.1} parent=0 // pred_region
    _
  $region21: #{rgcl_forward.1} parent=0 // pred_fallthru
    _
  // Predicated region
  $region22: #{rgcl_forward.1} parent=0 // pred_check
    _
  $region23: #{rgcl_forward.1} parent=0 // pred_check_branch
    %32 = sbr.rel (0) target = $region25
  $region24: #{rgcl_forward.1} parent=0 // pred_region
    _
  $region25: #{rgcl_forward.1} parent=0 // pred_fallthru
    _
  // Predicated region
  $region26: #{rgcl_forward.1} parent=0 // pred_check
    _
  $region27: #{rgcl_forward.1} parent=0 // pred_check_branch
    %34 = sbr.rel (0) target = $region29
  $region28: #{rgcl_forward.1} parent=0 // pred_region
    _
  $region29: #{rgcl_forward.1} parent=0 // pred_fallthru
    _
  // Predicated region
  $region30: #{rgcl_forward.1} parent=0 // pred_check
    _
  $region31: #{rgcl_forward.1} parent=0 // pred_check_branch
    %36 = sbr.rel (0) target = $region33
  $region32: #{rgcl_forward.1} parent=0 // pred_region
    _
  $region33: #{rgcl_forward.1} parent=0 // pred_fallthru
    _
  // Predicated region
  $region34: #{rgcl_forward.1} parent=0 // pred_check
    _
  $region35: #{rgcl_forward.1} parent=0 // pred_check_branch
    %38 = sbr.rel (0) target = $region37
  $region36: #{rgcl_forward.1} parent=0 // pred_region
    _
  $region37: #{rgcl_forward.1} parent=0 // pred_fallthru
    _
  // Predicated region
  $region38: #{rgcl_forward.1} parent=0 // pred_check
    _
  $region39: #{rgcl_forward.1} parent=0 // pred_check_branch
    %40 = sbr.rel (0) target = $region41
  $region40: #{rgcl_forward.1} parent=0 // pred_region
    _
  $region41: #{rgcl_forward.1} parent=0 // pred_fallthru
    _
  // Predicated region
  $region42: #{rgcl_forward.1} parent=0 // pred_check
    _
  $region43: #{rgcl_forward.1} parent=0 // pred_check_branch
    %42 = sbr.rel (0) target = $region45
  $region44: #{rgcl_forward.1} parent=0 // pred_region
    _
  $region45: #{rgcl_forward.1} parent=0 // pred_fallthru
    _
  // Predicated region
  $region46: #{rgcl_forward.1} parent=0 // pred_check
    _
  $region47: #{rgcl_forward.1} parent=0 // pred_check_branch
    %44 = sbr.rel (0) target = $region49
  $region48: #{rgcl_forward.1} parent=0 // pred_region
    _
  $region49: #{rgcl_forward.1} parent=0 // pred_fallthru
    _
  // Predicated region
  $region50: #{rgcl_forward.1} parent=0 // pred_check
    _
  $region51: #{rgcl_forward.1} parent=0 // pred_check_branch
    %46 = sbr.rel (0) target = $region53
  $region52: #{rgcl_forward.1} parent=0 // pred_region
    _
  $region53: #{rgcl_forward.1} parent=0 // pred_fallthru
    _
  %vm48 = vcmask 64512
  %49 = vst.msk [vmem:[%s14] sm:$0xff] %vm48, 0.0
  %v50 = vld [vmem:[%s1] sm:$0xf]
  %v51 = vld [vmem:[%s2] sm:$0xf]
  %vm52 = vcmask 261120
  %v54 = vsel %vm52, %v50, 0
  %v57 = vsel %vm52, %v51, 0
  %59 = vmatprep.subr.bf16.mxu0 0
  %60 = vmatpush1.bf16.xpose.msra.mxu0 %v57
  %61 = vmatprep.subr.bf16.mxu0 0
  %62 = vmatpush1.bf16.xpose.msra.mxu0 0
  %63 = vmatprep.subr.bf16.mxu0 0
  %64 = vmatpush1.bf16.xpose.msra.mxu0 0
  %65 = vmatprep.subr.bf16.mxu0 0
  %66 = vmatpush1.bf16.xpose.msra.mxu0 0
  %67 = vmatprep.subr.bf16.mxu0 0
  %68 = vmatpush1.bf16.xpose.msra.mxu0 0
  %69 = vmatprep.subr.bf16.mxu0 0
  %70 = vmatpush1.bf16.xpose.msra.mxu0 0
  %71 = vmatprep.subr.bf16.mxu0 0
  %72 = vmatpush1.bf16.xpose.msra.mxu0 0
  %73 = vmatprep.subr.bf16.mxu0 0
  %74 = vmatpush1.bf16.xpose.msra.mxu0 0
  %75 = vmatprep.subr.bf16.mxu0 0
  %76 = vmatpush1.bf16.xpose.msra.mxu0 0
  %77 = vmatprep.subr.bf16.mxu0 0
  %78 = vmatpush1.bf16.xpose.msra.mxu0 0
  %79 = vmatprep.subr.bf16.mxu0 0
  %80 = vmatpush1.bf16.xpose.msra.mxu0 0
  %81 = vmatprep.subr.bf16.mxu0 0
  %82 = vmatpush1.bf16.xpose.msra.mxu0 0
  %83 = vmatprep.subr.bf16.mxu0 0
  %84 = vmatpush1.bf16.xpose.msra.mxu0 0
  %85 = vmatprep.subr.bf16.mxu0 0
  %86 = vmatpush1.bf16.xpose.msra.mxu0 0
  %87 = vmatprep.subr.bf16.mxu0 0
  %88 = vmatpush1.bf16.xpose.msra.mxu0 0
  %89 = vmatprep.subr.bf16.mxu0 0
  %90 = vmatpush1.bf16.xpose.msra.mxu0 0
  %91 = vmatprep.mubr.bf16.mxu0 0
  %92 = vmatmul.mubr.bf16.gmra.mrb[0].mxu0 %v54
  %v93 = vpop.f32.mrb[0].mxu0
  %v94 = vadd.f32 0.0, %v93
  %v95 = vpop.f32.mrb[0].mxu0
  %v96 = vpop.f32.mrb[0].mxu0
  %v97 = vpop.f32.mrb[0].mxu0
  %98 = vdwg.mxu0
  %s99 = sld [smem:[#allocation2]]
  %p100 = scmp.ne.s32.totalorder %s99, 0
  %s101 = scalar_select %p100, 1, 0
  %s102 = scvt.s32.f32 %s101
  %v103 = vld [vmem:[%s3] sm:$0xff]
  %v104 = vld [vmem:[%s5] sm:$0xff]
  %v105 = vrcp.pop %v104
  %v106 = vmul.f32 1.0, %v105
  %v107 = vld [vmem:[%s7] sm:$0xff]
  %109 = vset.pattern.permute.xlu0 0
  %110 = vperm.xlu0 %109, %v103
  %v111 = vpop.permute.xlu0 %110
  %v113 = vsub.f32 %v94, %v111
  %115 = vset.pattern.permute.xlu0 0
  %116 = vperm.xlu0 %115, %v106
  %v117 = vpop.permute.xlu0 %116
  %v119 = vmul.f32 %v113, %v117
  %v120 = vsel %vm48, %v119, -inf
  %121 = vmax.xlane.f32.xlu0 %v120
  %v122 = vpop.xlane.xlu0 %121
  %v123 = vmax.f32 %v122, %v107
  %125 = vset.pattern.permute.xlu0 0
  %126 = vperm.xlu0 %125, %v123
  %v127 = vpop.permute.xlu0 %126
  %v129 = vsub.f32 %v119, %v127
  %v130 = vmul.f32 %v129, 1.442695
  %v131 = vpow.pop %v130
  %v132 = vsel %vm48, %v131, 0.0
  %133 = vadd.xlane.f32.xlu0 %v132
  %v134 = vpop.xlane.xlu0 %133
  %v135 = vsub.f32 0.0, %v123
  %v136 = vmul.f32 %v135, 1.442695
  %v137 = vpow.pop %v136
  %v138 = vsub.f32 %v134, %v137
  %v139 = vld [vmem:[%s9] sm:$0xff]
  %v140 = vmul.f32 %v139, 0.2
  %v141 = vsub.f32 %v107, %v123
  %v142 = vmul.f32 %v141, 1.442695
  %v143 = vpow.pop %v142
  %v144 = vmul.f32 %v140, %v143
  %v145 = vmul.f32 %v138, 0.8
  %v146 = vadd.f32 %v144, %v145
  %v147 = vstv %s102
  %v148 = vmul.f32 %v147, %v146
  %s149 = ssub.f32 1.0, %s102
  %v150 = vstv %s149
  %v151 = vmul.f32 %v150, %v138
  %v152 = vadd.f32 %v148, %v151
  %v153 = vadd.f32 %v152, 1e-10
  %v154 = vrcp.pop %v153
  %v155 = vmul.f32 1.0, %v154
  %v156 = vmul.f32 %v131, %v113
  %v157 = vsel %vm48, %v156, 0.0
  %158 = vadd.xlane.f32.xlu0 %v157
  %v159 = vpop.xlane.xlu0 %158
  %v160 = vmul.f32 %v131, %v119
  %v161 = vsel %vm48, %v160, 0.0
  %162 = vadd.xlane.f32.xlu0 %v161
  %v163 = vpop.xlane.xlu0 %162
  %v164 = vmul.f32 %v155, %v159
  %v165 = vrcp.pop 7.0
  %v166 = vmul.f32 %v152, %v165
  %v167 = vlog2.pop %v166
  %v168 = vmul.f32 %v167, 0.6931472
  %v169 = vadd.f32 %v168, %v123
  %v170 = vadd.f32 %v169, 8.0
  %v171 = vmul.f32 %v155, %v163
  %v172 = vsub.f32 %v170, %v171
  %v173 = vmax.f32 %v172, -5.0
  %v174 = vmin.f32 %v173, 5.0
  %v175 = vld [vmem:[%s11] sm:$0xff]
  %v176 = vmul.f32 %v175, 0.5
  %v177 = vmul.f32 %v174, 0.5
  %v178 = vadd.f32 %v176, %v177
  %v179 = vmul.f32 %v178, 1e-05
  %v180 = vsub.f32 %v104, %v179
  %v181 = vmax.f32 %v180, 0.005
  %v182 = vmin.f32 %v181, 0.05
  %vm183 = vcmask 7168
  %184 = vst.msk [vmem:[%s13] sm:$0xff] %vm183, %v123
  %186 = vrot.lane.b32.xlu0 %v152, 1
  %v187 = vpop.permute.xlu0 %186
  %vm189 = vcmask 15368
  %190 = vst.msk [vmem:[%s13] sm:$0xff] %vm189, %v187
  %192 = vrot.lane.b32.xlu0 %v178, 2
  %v193 = vpop.permute.xlu0 %192
  %vm195 = vcmask 23568
  %196 = vst.msk [vmem:[%s13] sm:$0xff] %vm195, %v193
  %198 = vrot.lane.b32.xlu0 %v182, 3
  %v199 = vpop.permute.xlu0 %198
  %vm201 = vcmask 31768
  %202 = vst.msk [vmem:[%s13] sm:$0xff] %vm201, %v199
  %v203 = vld [vmem:[%s4] sm:$0x1]
  %v204 = vld [vmem:[%s6] sm:$0x1]
  %v205 = vrcp.pop %v204
  %v206 = vmul.f32 1.0, %v205
  %v207 = vld [vmem:[%s8] sm:$0x1]
  %v209 = vlaneseq
  %v210 = vshrl.u32 %v209, 7
  %v211 = vsub.s32 0, %v210
  %v212 = vrot.slane %v203, %v211
  %v214 = vsub.f32 %v94, %v212
  %v216 = vlaneseq
  %v217 = vshrl.u32 %v216, 7
  %v218 = vsub.s32 0, %v217
  %v219 = vrot.slane %v206, %v218
  %v221 = vmul.f32 %v214, %v219
  %v222 = vsel %vm48, %v221, -inf
  %v223 = vrot.slane %v222, 4
  %v224 = vmax.f32 %v222, %v223
  %v225 = vrot.slane %v224, 2
  %v226 = vmax.f32 %v224, %v225
  %v227 = vrot.slane %v226, 1
  %v228 = vmax.f32 %v226, %v227
  %v229 = vmax.f32 %v228, %v207
  %v230 = vlaneseq
  %v231 = vshrl.u32 %v230, 7
  %v232 = vsub.s32 0, %v231
  %v233 = vrot.slane %v229, %v232
  %v234 = vsub.f32 %v221, %v233
  %v235 = vmul.f32 %v234, 1.442695
  %v236 = vpow.pop %v235
  %v237 = vsel %vm48, %v236, 0.0
  %v238 = vrot.slane %v237, 4
  %v239 = vadd.f32 %v237, %v238
  %v240 = vrot.slane %v239, 2
  %v241 = vadd.f32 %v239, %v240
  %v242 = vrot.slane %v241, 1
  %v243 = vadd.f32 %v241, %v242
  %v244 = vsub.f32 0.0, %v229
  %v245 = vmul.f32 %v244, 1.442695
  %v246 = vpow.pop %v245
  %v247 = vsub.f32 %v243, %v246
  %v248 = vld [vmem:[%s10] sm:$0x1]
  %v249 = vmul.f32 %v248, 0.2
  %v250 = vsub.f32 %v207, %v229
  %v251 = vmul.f32 %v250, 1.442695
  %v252 = vpow.pop %v251
  %v253 = vmul.f32 %v249, %v252
  %v254 = vmul.f32 %v247, 0.8
  %v255 = vadd.f32 %v253, %v254
  %v256 = vmul.f32 %v147, %v255
  %v257 = vmul.f32 %v150, %v247
  %v258 = vadd.f32 %v256, %v257
  %v259 = vadd.f32 %v258, 1e-10
  %v260 = vrcp.pop %v259
  %v261 = vmul.f32 1.0, %v260
  %v262 = vmul.f32 %v236, %v214
  %v263 = vsel %vm48, %v262, 0.0
  %v264 = vrot.slane %v263, 4
  %v265 = vadd.f32 %v263, %v264
  %v266 = vrot.slane %v265, 2
  %v267 = vadd.f32 %v265, %v266
  %v268 = vrot.slane %v267, 1
  %v269 = vadd.f32 %v267, %v268
  %v270 = vmul.f32 %v236, %v221
  %v271 = vsel %vm48, %v270, 0.0
  %v272 = vrot.slane %v271, 4
  %v273 = vadd.f32 %v271, %v272
  %v274 = vrot.slane %v273, 2
  %v275 = vadd.f32 %v273, %v274
  %v276 = vrot.slane %v275, 1
  %v277 = vadd.f32 %v275, %v276
  %v278 = vmul.f32 %v261, %v269
  %v279 = vmul.f32 %v258, %v165
  %v280 = vlog2.pop %v279
  %v281 = vmul.f32 %v280, 0.6931472
  %v282 = vadd.f32 %v281, %v229
  %v283 = vadd.f32 %v282, 8.0
  %v284 = vmul.f32 %v261, %v277
  %v285 = vsub.f32 %v283, %v284
  %v286 = vmax.f32 %v285, -5.0
  %v287 = vmin.f32 %v286, 5.0
  %v288 = vld [vmem:[%s12] sm:$0x1]
  %v289 = vmul.f32 %v288, 0.5
  %v290 = vmul.f32 %v287, 0.5
  %v291 = vadd.f32 %v289, %v290
  %v292 = vmul.f32 %v291, 1e-05
  %v293 = vsub.f32 %v204, %v292
  %v294 = vmax.f32 %v293, 0.005
  %v295 = vmin.f32 %v294, 0.05
  %vm296 = vcmask 57344
  %297 = vst.msk [vmem:[%s14] sm:$0x1] %vm296, %v229
  %298 = vst.msk [vmem:[%s14 + $0x1] sm:$0x1] %vm296, %v258
  %299 = vst.msk [vmem:[%s14 + $0x2] sm:$0x1] %vm296, %v291
  %300 = vst.msk [vmem:[%s14 + $0x3] sm:$0x1] %vm296, %v295
  %v301 = vsel %vm183, %v164, 0.0
  %v302 = vrot.slane %v301, 4
  %v303 = vadd.f32 %v301, %v302
  %v304 = vrot.slane %v303, 2
  %v305 = vadd.f32 %v303, %v304
  %v306 = vrot.slane %v305, 1
  %v307 = vadd.f32 %v305, %v306
  %v308 = vmul.f32 %v307, 0.125
  %v309 = vsel %vm296, %v278, 0.0
  %310 = vadd.xlane.f32.xlu0 %v309
  %v311 = vpop.xlane.xlu0 %310
  %v312 = vmul.f32 %v311, 0.125
  %v313 = vadd.f32 %v308, %v312
  %v314 = vsel %vm183, %v174, 0.0
  %v315 = vrot.slane %v314, 4
  %v316 = vadd.f32 %v314, %v315
  %v317 = vrot.slane %v316, 2
  %v318 = vadd.f32 %v316, %v317
  %v319 = vrot.slane %v318, 1
  %v320 = vadd.f32 %v318, %v319
  %v321 = vmul.f32 %v320, 0.125
  %v322 = vsel %vm296, %v287, 0.0
  %323 = vadd.xlane.f32.xlu0 %v322
  %v324 = vpop.xlane.xlu0 %323
  %v325 = vmul.f32 %v324, 0.125
  %327 = vset.pattern.permute.xlu0 0
  %328 = vperm.xlu0 %327, %v313
  %v329 = vpop.permute.xlu0 %328
  %331 = vst.msk [vmem:[%s14 + $0x4] sm:$0x1] %vm296, %v329
  %333 = vset.pattern.permute.xlu0 0
  %334 = vperm.xlu0 %333, %v321
  %v335 = vpop.permute.xlu0 %334
  %337 = vst.msk [vmem:[%s14 + $0x5] sm:$0x1] %vm296, %v335
  %338 = vst.msk [vmem:[%s14 + $0x6] sm:$0x1] %vm296, %v325
  // Predicated region
  $region54: #{rgcl_forward.1} parent=0 // pred_check
    _
  $region55: #{rgcl_forward.1} parent=0 // pred_check_branch
    %340 = sbr.rel (0) target = $region57
  $region56: #{rgcl_forward.1} parent=0 // pred_region
    _
  $region57: #{rgcl_forward.1} parent=0 // pred_fallthru
    _
  // Predicated region
  $region58: #{rgcl_forward.1} parent=0 // pred_check
    _
  $region59: #{rgcl_forward.1} parent=0 // pred_check_branch
    %342 = sbr.rel (0) target = $region61
  $region60: #{rgcl_forward.1} parent=0 // pred_region
    _
  $region61: #{rgcl_forward.1} parent=0 // pred_fallthru
    _
  // Predicated region
  $region62: #{rgcl_forward.1} parent=0 // pred_check
    _
  $region63: #{rgcl_forward.1} parent=0 // pred_check_branch
    %344 = sbr.rel (0) target = $region65
  $region64: #{rgcl_forward.1} parent=0 // pred_region
    _
  $region65: #{rgcl_forward.1} parent=0 // pred_fallthru
    _
  // Predicated region
  $region66: #{rgcl_forward.1} parent=0 // pred_check
    _
  $region67: #{rgcl_forward.1} parent=0 // pred_check_branch
    %346 = sbr.rel (0) target = $region69
  $region68: #{rgcl_forward.1} parent=0 // pred_region
    _
  $region69: #{rgcl_forward.1} parent=0 // pred_fallthru
    _

</llo_original>
